<compile_context>
chip_gen: v5e
topology: v5e:2x2
jax: 0.10.0
libtpu: 0.0.40
codegen_flags: <defaults>
</compile_context>

<pallas_src>
import functools

import jax
import jax.numpy as jnp
from jax.experimental import pallas as pl
from jax.experimental.pallas import tpu as pltpu


def _round_up(x, m):
    return ((x + m - 1) // m) * m


def _vmem_plan():
    """Generation-aware (compute budget, scoped vmem limit, row-tile cap)."""
    try:
        cap = pltpu.get_tpu_info().vmem_capacity_bytes
    except Exception:
        cap = 64 * 2**20                      # conservative (v7x-sized) fallback
    if cap >= 96 * 2**20:                     # v5e / v6e: 128 MiB VMEM
        return 96 * 2**20, 100 * 2**20, 2048
    return 40 * 2**20, 48 * 2**20, 1024       # v7x: 64 MiB per TensorCore


# ----------------------------------------------------------------------------
# Pallas kernel: fused dual linear heads
#   out[:, :L]   = x @ W_hard^T + b_hard   (logits)
#   out[:, L:2L] = x @ W_soft^T + b_soft   (soft_logits)
# bf16 MXU operands, f32 accumulation, f32 bias-add.
# ----------------------------------------------------------------------------
def _fused_head_kernel(x_ref, w_ref, b_ref, out_ref):
    # In-kernel cast: no-op when the encoder already feeds bf16; otherwise it
    # avoids a separate HBM cast pass over x.
    x = x_ref[...].astype(jnp.bfloat16)
    acc = jnp.dot(x, w_ref[...], preferred_element_type=jnp.float32)
    out_ref[...] = (acc + b_ref[...]).astype(out_ref.dtype)


def pack_heads(w_hard, b_hard, w_soft, b_soft):
    """Prepack both nn.Linear heads into one lane-dense fused weight/bias.

    Done once at init (outside the forward jit), not per step.
    w_*: [L, H] (PyTorch nn.Linear layout), b_*: [L].
    Returns w_fused [H, Np] bf16, b_fused [1, Np] f32 with Np = round_up(2L, 128).
    """
    L, _ = w_hard.shape
    N = 2 * L
    Np = _round_up(max(N, 128), 128)
    w_cat = jnp.concatenate([w_hard.T, w_soft.T], axis=1)          # [H, 2L]
    b_cat = jnp.concatenate([b_hard, b_soft], axis=0)              # [2L]
    if Np != N:
        w_cat = jnp.pad(w_cat, ((0, 0), (0, Np - N)))
        b_cat = jnp.pad(b_cat, (0, Np - N))
    return w_cat.astype(jnp.bfloat16), b_cat.reshape(1, Np).astype(jnp.float32)


def dual_head_classifier(x, w_fused, b_fused, num_labels):
    """x: [M, H] hidden states (bf16 preferred; f32 accepted, cast in-kernel).
    w_fused: [H, Np] bf16, b_fused: [1, Np] f32.
    Returns (logits [M, L], soft_logits [M, L]) in float32."""
    M, H = x.shape
    Np = w_fused.shape[1]
    L = num_labels

    budget, vmem_limit, tm_cap = _vmem_plan()

    # Row tile sized to fill the per-generation VMEM budget. Double-buffered
    # x / out tiles; the constant W / bias blocks are also counted twice
    # (default pipeline double-buffers them).
    per_row = 2 * (H * x.dtype.itemsize + Np * 4)
    fixed = 2 * (H * Np * 2 + Np * 4)
    avail = max(budget - fixed, 8 * per_row)
    tm = min(tm_cap, max(8, (avail // per_row) // 8 * 8))
    tm = min(tm, _round_up(M, 8))
    if M > 8:
        # Keep at least 2 grid steps so v7x's two TensorCores both get work.
        tm = min(tm, max(8, _round_up(pl.cdiv(M, 2), 8)))

    # Ragged last block (M % tm != 0) is masked by Pallas: no host-side pad.
    grid = (pl.cdiv(M, tm),)

    cost = pl.CostEstimate(
        flops=2 * M * H * Np,
        transcendentals=0,
        bytes_accessed=M * H * x.dtype.itemsize + H * Np * 2 + Np * 4 + M * Np * 4,
    )

    out = pl.pallas_call(
        _fused_head_kernel,
        out_shape=jax.ShapeDtypeStruct((M, Np), jnp.float32),
        grid_spec=pltpu.PrefetchScalarGridSpec(
            num_scalar_prefetch=0,
            grid=grid,
            in_specs=[
                pl.BlockSpec((tm, H), lambda i: (i, 0)),    # x row tile
                pl.BlockSpec((H, Np), lambda i: (0, 0)),    # fused W (constant block)
                pl.BlockSpec((1, Np), lambda i: (0, 0)),    # fused bias (constant block)
            ],
            out_specs=pl.BlockSpec((tm, Np), lambda i: (i, 0)),
        ),
        compiler_params=pltpu.CompilerParams(
            dimension_semantics=("parallel",),
            vmem_limit_bytes=vmem_limit,
        ),
        cost_estimate=cost,
    )(x, w_fused, b_fused)

    # Only remaining post-kernel copies: the two narrow column slices needed
    # to return [M, L]-shaped outputs (module contract). Row slice is gone.
    return out[:, :L], out[:, L:2 * L]


# ----------------------------------------------------------------------------
# Model wrapper mirroring AutoModelForMultiTaskTokenClassification.forward
# ----------------------------------------------------------------------------
def init_params(key, *, vocab_size, hidden_size, num_labels):
    k_emb, k_wh, k_bh, k_ws, k_bs = jax.random.split(key, 5)
    # TODO(synk): pretrained AutoModel backbone cannot be reproduced without a
    # checkpoint; a deterministic bf16 embedding lookup stands in for its
    # last_hidden_state.
    embedding = (jax.random.normal(k_emb, (vocab_size, hidden_size),
                                   jnp.float32) * 0.02).astype(jnp.bfloat16)
    # nn.Linear(hidden_size, num_labels): weight [L, H], bias [L]
    bound = 1.0 / (hidden_size ** 0.5)
    w_hard = jax.random.uniform(k_wh, (num_labels, hidden_size), jnp.float32,
                                -bound, bound)
    b_hard = jax.random.uniform(k_bh, (num_labels,), jnp.float32, -bound, bound)
    w_soft = jax.random.uniform(k_ws, (num_labels, hidden_size), jnp.float32,
                                -bound, bound)
    b_soft = jax.random.uniform(k_bs, (num_labels,), jnp.float32, -bound, bound)
    # Prepack the fused head weights once (not inside every forward).
    w_fused, b_fused = pack_heads(w_hard, b_hard, w_soft, b_soft)
    return dict(embedding=embedding,
                w_hard=w_hard, b_hard=b_hard, w_soft=w_soft, b_soft=b_soft,
                w_fused=w_fused, b_fused=b_fused)


@functools.partial(jax.jit, static_argnames=("hidden_size",))
def forward(params, input_ids, attention_mask, *, hidden_size):
    # --- synthetic LM: bf16 last_hidden_state [B, S, H] (bf16 so the fused
    #     head kernel reads 2 B/elem straight from the encoder fusion) ---
    last_hidden_state = params["embedding"][input_ids]               # [B,S,H] bf16
    last_hidden_state = last_hidden_state * attention_mask[..., None].astype(
        last_hidden_state.dtype)

    # --- reshape(-1, hidden_size), exactly as in the PyTorch module ---
    pooler_output = last_hidden_state.reshape(-1, hidden_size)       # [B*S, H]

    # --- Pallas: fused dual classification heads (the hot path) ---
    logits, soft_logits = dual_head_classifier(
        pooler_output, params["w_fused"], params["b_fused"],
        num_labels=params["w_hard"].shape[0])
    return {
        "last_hidden_state": last_hidden_state,
        "logits": logits,            # [B*S, num_labels], float32
        "soft_logits": soft_logits,  # [B*S, num_labels], float32
    }


if __name__ == "__main__":
    B, S, H, L, VOCAB = 2, 8, 32, 8, 64

    key = jax.random.PRNGKey(0)
    k_params, k_ids = jax.random.split(key)
    params = init_params(k_params, vocab_size=VOCAB, hidden_size=H,
                         num_labels=L)

    input_ids = jax.random.randint(k_ids, (B, S), 0, VOCAB, dtype=jnp.int32)
    attention_mask = jnp.ones((B, S), dtype=jnp.int32)

    out = forward(params, input_ids, attention_mask, hidden_size=H)
    jax.block_until_ready(out)

    # Self-check against a plain-JAX reference of the heads: bf16-rounded
    # operands, f32 accumulation (matches the kernel's numerics).
    x = out["last_hidden_state"].reshape(-1, H).astype(jnp.float32)
    wh = params["w_hard"].astype(jnp.bfloat16).astype(jnp.float32)
    ws = params["w_soft"].astype(jnp.bfloat16).astype(jnp.float32)
    ref_hard = x @ wh.T + params["b_hard"]
    ref_soft = x @ ws.T + params["b_soft"]
    assert out["logits"].shape == (B * S, L)
    assert out["soft_logits"].shape == (B * S, L)
    assert jnp.allclose(out["logits"], ref_hard, atol=5e-3, rtol=5e-3)
    assert jnp.allclose(out["soft_logits"], ref_soft, atol=5e-3, rtol=5e-3)

    print("KERNEL_OK")
</pallas_src>

<mosaic_0001>
module attributes {stable_mosaic.version = 11 : i64} {
  func.func @_fused_head_kernel(%arg0: i32, %arg1: memref<8x32xbf16, #tpu.memory_space<vmem>>, %arg2: memref<32x128xbf16, #tpu.memory_space<vmem>>, %arg3: memref<1x128xf32, #tpu.memory_space<vmem>>, %arg4: memref<8x128xf32, #tpu.memory_space<vmem>>) attributes {dimension_semantics = [#tpu.dimension_semantics<parallel>], iteration_bounds = array<i64: 2>, scalar_prefetch = 0 : i64, scratch_operands = 0 : i64, tpu.core_type = #tpu.core_type<tc>, window_params = [{transform_indices = @transform_0, window_bounds = array<i64: 8, 32>}, {pipeline_mode = #tpu.pipeline_mode<synchronous>, transform_indices = @transform_1, window_bounds = array<i64: 32, 128>}, {pipeline_mode = #tpu.pipeline_mode<synchronous>, transform_indices = @transform_2, window_bounds = array<i64: 1, 128>}, {transform_indices = @transform_3, window_bounds = array<i64: 8, 128>}]} {
    %c0 = arith.constant 0 : index
    %c0_0 = arith.constant 0 : index
    %0 = vector.load %arg1[%c0, %c0_0] : memref<8x32xbf16, #tpu.memory_space<vmem>>, vector<8x32xbf16>
    %c0_1 = arith.constant 0 : index
    %c0_2 = arith.constant 0 : index
    %1 = vector.load %arg2[%c0_1, %c0_2] : memref<32x128xbf16, #tpu.memory_space<vmem>>, vector<32x128xbf16>
    %cst = arith.constant dense<0.000000e+00> : vector<8x128xf32>
    %2 = tpu.matmul %0, %1, %cst {dimension_numbers = #tpu.dot_dimension_numbers<[1], [0], [0], [1], [0, 0, 1, 1], [], []>} : vector<8x32xbf16>, vector<32x128xbf16>, vector<8x128xf32> -> vector<8x128xf32>
    %c0_3 = arith.constant 0 : index
    %c0_4 = arith.constant 0 : index
    %3 = vector.load %arg3[%c0_3, %c0_4] : memref<1x128xf32, #tpu.memory_space<vmem>>, vector<1x128xf32>
    %4 = vector.broadcast %3 : vector<1x128xf32> to vector<8x128xf32>
    %5 = arith.addf %2, %4 : vector<8x128xf32>
    %c0_5 = arith.constant 0 : index
    %c0_6 = arith.constant 0 : index
    %6 = vector.load %arg4[%c0_5, %c0_6] : memref<8x128xf32, #tpu.memory_space<vmem>>, vector<8x128xf32>
    tpu.vector_store %arg4[%c0_5, %c0_6], %5 {strides = array<i32>} : memref<8x128xf32, #tpu.memory_space<vmem>>, vector<8x128xf32>,
    return
  }
  func.func @transform_0(%arg0: i32) -> (i32, i32) {
    %c0_i32 = arith.constant 0 : i32
    %c0_i32_0 = arith.constant 0 : i32
    return %arg0, %c0_i32 : i32, i32
  }
  func.func @transform_1(%arg0: i32) -> (i32, i32) {
    %c0_i32 = arith.constant 0 : i32
    %c0_i32_0 = arith.constant 0 : i32
    %c0_i32_1 = arith.constant 0 : i32
    return %c0_i32, %c0_i32_0 : i32, i32
  }
  func.func @transform_2(%arg0: i32) -> (i32, i32) {
    %c0_i32 = arith.constant 0 : i32
    %c0_i32_0 = arith.constant 0 : i32
    %c0_i32_1 = arith.constant 0 : i32
    return %c0_i32, %c0_i32_0 : i32, i32
  }
  func.func @transform_3(%arg0: i32) -> (i32, i32) {
    %c0_i32 = arith.constant 0 : i32
    %c0_i32_0 = arith.constant 0 : i32
    return %arg0, %c0_i32 : i32, i32
  }
}

</mosaic_0001>

<llo_original>
// kernel: forward.1
$region0: #{forward.1}
  #allocation0 [shape = 'u32[]', space=smem, size = 0x4, offset = 0x4, fixed_abs, tag = 'smem constant byte address 0x4 - core index']
  #allocation1 [shape = 'u32[72,128]{1,0:T(1,128)}', space=vmem, size = 0x9000, scoped, tag = 'internal scratch']
  %s0 = inlined_call_operand.vmem [shape: bf16[16,32], index: 0, kind: input, shape index: {}]
  %s1 = inlined_call_operand.vmem [shape: bf16[32,128], index: 1, kind: input, shape index: {}]
  %s2 = inlined_call_operand.vmem [shape: f32[1,128], index: 2, kind: input, shape index: {}]
  %s3 = inlined_call_operand.vmem [shape: f32[16,128], index: 3, kind: output, shape index: {}]
  %s4 = sld [smem:[#allocation0]]
  $region45: #{forward.1} parent=0
    _
  %s6 = ssub.s32 1, %s4
  %s7 = scalar_select 0, %s6, %s4
  loop: start=0, step=1, limit=4
  $region2: #{forward.1} parent=0 // loop_pre_header
    _
  $region3: #{forward.1} parent=0 // loop_header
    %s9 = sphi 0, %s13
    %p10 = scmp.ge.s32.totalorder %s9, 4
    %s19 = sphi 0, %s21
    %s22 = sphi 0, %s19
    %s23 = sphi 0, %s22
    %s39 = sphi 0, %s23
    %s43 = sphi 0, %s43
    %s45 = sphi 0, %s43
    %s46 = sphi 0, %s45
    %s60 = sphi 0, %s46
    %s64 = sphi 0, %s64
    %s66 = sphi 0, %s64
    %s67 = sphi 0, %s66
    %s81 = sphi 0, %s67
    %s87 = sphi 0, %s89
    %s90 = sphi 0, %s87
    %s91 = sphi 0, %s90
    %s107 = sphi 0, %s91
  $region4: #{forward.1} parent=0 // loop_header_branch
    %12 = sbr.rel (%p10) target = $region8
  $region5: #{forward.1} parent=0 // loop_body
    %s14 = ssub.s32 %s9, 1
    %s15 = ssub.s32 %s9, 2
    %s16 = sadd.s32 %s9, 1
    %s17 = ssub.s32 %s9, %s16
    %p18 = scmp.eq.s32.totalorder %s17, 0
    %s20 = sadd.s32 %s19, 1
    %s21 = scalar_select %p18, %s19, %s20
    %p24 = pneg %p18
    %p25 = scmp.eq.s32.totalorder %s9, 1
    %p26 = por %p24, %p25
    %p27 = scmp.ne.s32.totalorder %s19, %s22
    %p28 = scmp.eq.s32.totalorder %s9, 0
    %p29 = por %p27, %p28
    %p30 = scmp.ne.s32.totalorder %s19, %s22
    %p31 = scmp.eq.s32.totalorder %s14, 1
    %p32 = por %p30, %p31
    %p33 = scmp.ne.s32.totalorder %s22, %s23
    %p34 = scmp.eq.s32.totalorder %s14, 0
    %p35 = por %p33, %p34
    %p36 = scmp.ne.s32.totalorder %s22, %s23
    %p37 = scmp.eq.s32.totalorder %s15, 1
    %p38 = por %p36, %p37
    %p40 = scmp.ne.s32.totalorder %s23, %s39
    %p41 = scmp.eq.s32.totalorder %s15, 0
    %p42 = por %p40, %p41
    %s44 = sadd.s32 %s43, 1
    %p47 = scmp.eq.s32.totalorder %s9, 1
    %p48 = scmp.ne.s32.totalorder %s43, %s45
    %p49 = scmp.eq.s32.totalorder %s9, 0
    %p50 = por %p48, %p49
    %p51 = scmp.ne.s32.totalorder %s43, %s45
    %p52 = scmp.eq.s32.totalorder %s14, 1
    %p53 = por %p51, %p52
    %p54 = scmp.ne.s32.totalorder %s45, %s46
    %p55 = scmp.eq.s32.totalorder %s14, 0
    %p56 = por %p54, %p55
    %p57 = scmp.ne.s32.totalorder %s45, %s46
    %p58 = scmp.eq.s32.totalorder %s15, 1
    %p59 = por %p57, %p58
    %p61 = scmp.ne.s32.totalorder %s46, %s60
    %p62 = scmp.eq.s32.totalorder %s15, 0
    %p63 = por %p61, %p62
    %s65 = sadd.s32 %s64, 1
    %p68 = scmp.eq.s32.totalorder %s9, 1
    %p69 = scmp.ne.s32.totalorder %s64, %s66
    %p70 = scmp.eq.s32.totalorder %s9, 0
    %p71 = por %p69, %p70
    %p72 = scmp.ne.s32.totalorder %s64, %s66
    %p73 = scmp.eq.s32.totalorder %s14, 1
    %p74 = por %p72, %p73
    %p75 = scmp.ne.s32.totalorder %s66, %s67
    %p76 = scmp.eq.s32.totalorder %s14, 0
    %p77 = por %p75, %p76
    %p78 = scmp.ne.s32.totalorder %s66, %s67
    %p79 = scmp.eq.s32.totalorder %s15, 1
    %p80 = por %p78, %p79
    %p82 = scmp.ne.s32.totalorder %s67, %s81
    %p83 = scmp.eq.s32.totalorder %s15, 0
    %p84 = por %p82, %p83
    %s85 = ssub.s32 %s9, %s16
    %p86 = scmp.eq.s32.totalorder %s85, 0
    %s88 = sadd.s32 %s87, 1
    %s89 = scalar_select %p86, %s87, %s88
    %p92 = pneg %p86
    %p93 = scmp.eq.s32.totalorder %s9, 1
    %p94 = por %p92, %p93
    %p95 = scmp.ne.s32.totalorder %s87, %s90
    %p96 = scmp.eq.s32.totalorder %s9, 0
    %p97 = por %p95, %p96
    %p98 = scmp.ne.s32.totalorder %s87, %s90
    %p99 = scmp.eq.s32.totalorder %s14, 1
    %p100 = por %p98, %p99
    %p101 = scmp.ne.s32.totalorder %s90, %s91
    %p102 = scmp.eq.s32.totalorder %s14, 0
    %p103 = por %p101, %p102
    %p104 = scmp.ne.s32.totalorder %s90, %s91
    %p105 = scmp.eq.s32.totalorder %s15, 1
    %p106 = por %p104, %p105
    %p108 = scmp.ne.s32.totalorder %s91, %s107
    %p109 = scmp.eq.s32.totalorder %s15, 0
    %p110 = por %p108, %p109
    %p111 = scmp.le.s32.totalorder 1, %s9
    %p112 = scmp.lt.s32.totalorder %s9, 3
    %p113 = pnand %p111, %p112
    %p114 = pneg %p113
    // Predicated region
    $region9: #{forward.1} parent=5 // pred_check
      _
    $region10: #{forward.1} parent=5 // pred_check_branch
      %116 = sbr.rel (%p113) target = $region12
    $region11: #{forward.1} parent=5 // pred_region
      %s117 = ssub.s32 %s9, 1
      // Predicated region
      $region13: #{forward.1} parent=11 // pred_check
        %p118 = pneg %p56
      $region14: #{forward.1} parent=11 // pred_check_branch
        %120 = sbr.rel (%p118) target = $region16
      $region15: #{forward.1} parent=11 // pred_region
        _
      $region16: #{forward.1} parent=11 // pred_fallthru
        _
      // Predicated region
      $region17: #{forward.1} parent=11 // pred_check
        %p121 = pneg %p77
      $region18: #{forward.1} parent=11 // pred_check_branch
        %123 = sbr.rel (%p121) target = $region20
      $region19: #{forward.1} parent=11 // pred_region
        _
      $region20: #{forward.1} parent=11 // pred_fallthru
        _
    $region12: #{forward.1} parent=5 // pred_fallthru
      _
    %p124 = scmp.lt.s32.totalorder %s9, 2
    // Predicated region
    $region21: #{forward.1} parent=5 // pred_check
      %p125 = pneg %p124
    $region22: #{forward.1} parent=5 // pred_check_branch
      %127 = sbr.rel (%p125) target = $region24
    $region23: #{forward.1} parent=5 // pred_region
      // Predicated region
      $region25: #{forward.1} parent=23 // pred_check
        %p128 = pneg %p29
      $region26: #{forward.1} parent=23 // pred_check_branch
        %130 = sbr.rel (%p128) target = $region28
      $region27: #{forward.1} parent=23 // pred_region
        %p131 = scmp.lt.s32.totalorder %s9, 1
        %s132 = scalar_select %p131, %s9, 1
        %s133 = smul.addr %s132, 4
        %s134 = scalar_lea.vmem %s0, %s133
      $region28: #{forward.1} parent=23 // pred_fallthru
        _
    $region24: #{forward.1} parent=5 // pred_fallthru
      _
    %p135 = scmp.le.s32.totalorder 1, %s9
    %p136 = scmp.lt.s32.totalorder %s9, 3
    %p137 = pnand %p135, %p136
    %p138 = pneg %p137
    // Predicated region
    $region29: #{forward.1} parent=5 // pred_check
      _
    $region30: #{forward.1} parent=5 // pred_check_branch
      %140 = sbr.rel (%p137) target = $region32
    $region31: #{forward.1} parent=5 // pred_region
      %s141 = ssub.s32 %s9, 1
      %p142 = scmp.lt.s32.totalorder %s14, 1
      %s143 = scalar_select %p142, %s14, 1
      %s144 = smul.addr %s143, 4
      %s145 = scalar_lea.vmem %s0, %s144
      %p146 = pneg %p35
      %p147 = pneg %p32
      %p148 = pneg %p56
      %p149 = pneg %p53
      %p150 = pneg %p77
      %p151 = pneg %p74
      %p152 = pneg %p103
      %p153 = pneg %p100
      %p154 = scmp.lt.s32.totalorder %s14, 1
      %s155 = scalar_select %p154, %s14, 1
      %s156 = smul.addr %s155, 8
      %s157 = scalar_lea.vmem %s3, %s156
      %p158 = scmp.lt.s32.totalorder %s14, 1
      %s159 = scalar_select %p158, %s14, 1
      %s160 = smul.addr %s159, 4
      %s161 = scalar_lea.vmem %s0, %s160
      %p162 = scmp.lt.s32.totalorder %s14, 1
      %s163 = scalar_select %p162, %s14, 1
      %s164 = smul.addr %s163, 8
      %s165 = scalar_lea.vmem %s3, %s164
      %v167 = vld [vmem:[%s161] sm:$0xf]
      %v168 = vld [vmem:[%s1] sm:$0xf]
      %v169 = vld [vmem:[%s1 + $0x4] sm:$0xf]
      %v170 = vld [vmem:[%s1 + $0x8] sm:$0xf]
      %v171 = vld [vmem:[%s1 + $0xc] sm:$0xf]
      %v172 = vld [vmem:[%s2] sm:$0x1]
      %v174 = vperm.slane %v172, 0
      %v180 = vunpack.c.l.b16 %v168
      %v181 = vunpack.c.l.b16 %v169
      %v182 = vunpack.c.l.b16 %v170
      %v183 = vunpack.c.l.b16 %v171
      %v184 = vpack.c.b16 %v181, %v180
      %v185 = vpack.c.b16 %v183, %v182
      %vm188 = vcmask 261120
      %v190 = vsel %vm188, %v167, 0
      %192 = vmatpush.bf16.msra.mxu0 0
      %193 = vmatpush.bf16.msra.mxu0 0
      %194 = vmatpush.bf16.msra.mxu0 0
      %195 = vmatpush.bf16.msra.mxu0 0
      %196 = vmatpush.bf16.msra.mxu0 0
      %197 = vmatpush.bf16.msra.mxu0 0
      %198 = vmatpush.bf16.msra.mxu0 %v185
      %199 = vmatpush.bf16.msra.mxu0 %v184
      %200 = vmatmul.bf16.gmra.mxu0 %v190
      %v201 = vpop.f32.mrf.mxu0
      %v202 = vadd.f32 %v174, %v201
      %v203 = vpop.f32.mrf.mxu0
      %204 = vdwg.mxu0
      %205 = vst [vmem:[%s165] sm:$0xff] %v202
      %p206 = scmp.lt.s32.totalorder %s14, 1
      %s207 = scalar_select %p206, %s14, 1
      %s208 = smul.addr %s207, 8
      %s209 = scalar_lea.vmem %s3, %s208
      // Predicated region
      $region33: #{forward.1} parent=31 // pred_check
        %p210 = pneg %p100
      $region34: #{forward.1} parent=31 // pred_check_branch
        %212 = sbr.rel (%p210) target = $region36
      $region35: #{forward.1} parent=31 // pred_region
        _
      $region36: #{forward.1} parent=31 // pred_fallthru
        _
    $region32: #{forward.1} parent=5 // pred_fallthru
      _
    %p213 = scmp.le.s32.totalorder 2, %s9
    // Predicated region
    $region37: #{forward.1} parent=5 // pred_check
      %p214 = pneg %p213
    $region38: #{forward.1} parent=5 // pred_check_branch
      %216 = sbr.rel (%p214) target = $region40
    $region39: #{forward.1} parent=5 // pred_region
      %s217 = ssub.s32 %s9, 2
      // Predicated region
      $region41: #{forward.1} parent=39 // pred_check
        %p218 = pneg %p106
      $region42: #{forward.1} parent=39 // pred_check_branch
        %220 = sbr.rel (%p218) target = $region44
      $region43: #{forward.1} parent=39 // pred_region
        %p221 = scmp.lt.s32.totalorder %s15, 1
        %s222 = scalar_select %p221, %s15, 1
        %s223 = smul.addr %s222, 8
        %s224 = scalar_lea.vmem %s3, %s223
      $region44: #{forward.1} parent=39 // pred_fallthru
        _
    $region40: #{forward.1} parent=5 // pred_fallthru
      _
  $region6: #{forward.1} parent=0 // loop_footer
    %s13 = sadd.s32 1, %s9
  $region7: #{forward.1} parent=0 // loop_footer_branch
    %8 = sbr.rel target = $region3
  $region8: #{forward.1} parent=0 // loop_exit
    _

</llo_original>
